<compile_context>
chip_gen: v7x
topology: tpu7x:2x2x1
jax: 0.10.0
libtpu: 0.0.40
codegen_flags: <defaults>
</compile_context>

<pallas_src>
import jax
import jax.numpy as jnp
from jax.experimental import pallas as pl
from jax.experimental.pallas import tpu as pltpu


# ----------------------------- helpers ---------------------------------------


def _round_up(x, m):
    return ((x + m - 1) // m) * m


def _chip_defaults():
    """(tm_target, tk_target, vmem_limit_bytes) chosen per TPU generation."""
    vmem_cap = None
    try:
        info = pltpu.get_tpu_info()
        vmem_cap = getattr(info, "vmem_capacity_bytes", None)
    except Exception:
        vmem_cap = None
    if vmem_cap is None or vmem_cap < 100 * 1024 * 1024:
        # v7x-class (64 MiB VMEM per TC) or unknown: conservative budget.
        return 384, 1024, 48 * 1024 * 1024
    # v5e / v6e (128 MiB VMEM): big token tile so weight streaming stops binding.
    return 768, 2048, 96 * 1024 * 1024


def _vmem_estimate(tm, tk, d_model, x_isz, out_isz, f32_out):
    """Conservative VMEM estimate (double-buffered inputs/outputs + h tile)."""
    xb = 2 * tm * d_model * x_isz
    w1b = 2 * d_model * tk * 2            # bf16
    w2b = 2 * tk * d_model * 2            # bf16
    bb = 2 * (tk + d_model) * 4           # f32 biases
    outb = 2 * tm * d_model * out_isz
    accb = 0 if f32_out else tm * d_model * 4
    hb = tm * tk * 4                      # f32 intermediate tile
    return xb + w1b + w2b + bb + outb + accb + hb


# ----------------------------- kernels ----------------------------------------


def _ffn_kernel_accout(x_ref, w1_ref, b1_ref, w2_ref, b2_ref, o_ref):
    """f32 output: accumulate directly into the resident output block."""
    k = pl.program_id(1)

    @pl.when(k == 0)
    def _init():
        o_ref[...] = jnp.broadcast_to(b2_ref[...], o_ref.shape)

    xb = x_ref[...].astype(w1_ref.dtype)                      # in-kernel bf16 cast
    h = jnp.dot(xb, w1_ref[...], preferred_element_type=jnp.float32)
    h = jnp.maximum(h + b1_ref[...], 0.0)                     # bias + ReLU in f32 (VPU)
    # dropout (eval mode) -> identity
    o_ref[...] += jnp.dot(h.astype(w2_ref.dtype), w2_ref[...],
                          preferred_element_type=jnp.float32)


def _ffn_kernel_castout(x_ref, w1_ref, b1_ref, w2_ref, b2_ref, o_ref, acc_ref):
    """Non-f32 output: accumulate in f32 scratch, cast once at the last k step."""
    k = pl.program_id(1)

    @pl.when(k == 0)
    def _init():
        acc_ref[...] = jnp.broadcast_to(b2_ref[...], acc_ref.shape)

    xb = x_ref[...].astype(w1_ref.dtype)
    h = jnp.dot(xb, w1_ref[...], preferred_element_type=jnp.float32)
    h = jnp.maximum(h + b1_ref[...], 0.0)
    # dropout (eval mode) -> identity
    acc_ref[...] += jnp.dot(h.astype(w2_ref.dtype), w2_ref[...],
                            preferred_element_type=jnp.float32)

    @pl.when(k == pl.num_programs(1) - 1)
    def _finalize():
        o_ref[...] = acc_ref[...].astype(o_ref.dtype)


# ----------------------------- wrapper -----------------------------------------


def positionwise_ffn(x, w1, b1, w2, b2, *, compute_dtype=jnp.bfloat16):
    """x: [..., d_model] -> [..., d_model] with W1:[d_model,d_ff], W2:[d_ff,d_model]."""
    orig_shape = x.shape
    d_model = x.shape[-1]
    d_ff = w1.shape[1]
    T = 1
    for s in orig_shape[:-1]:
        T *= s
    x2d = x.reshape(T, d_model)
    out_dtype = x.dtype
    f32_out = jnp.dtype(out_dtype) == jnp.dtype(jnp.float32)

    tm_target, tk_target, vmem_limit = _chip_defaults()
    budget = int(0.85 * vmem_limit)

    x_isz = jnp.dtype(x.dtype).itemsize
    out_isz = jnp.dtype(out_dtype).itemsize

    # ---- d_ff chunk (tk): fully VMEM-resident weights when they fit, else streamed ----
    d_ff_128 = _round_up(d_ff, 128)
    w_resident_bytes = 2 * d_model * d_ff_128 * 2  # W1 + W2 in bf16
    if w_resident_bytes <= budget // 3:
        tk = d_ff_128                               # n_k == 1 -> weights DMA'd once
    else:
        tk = min(tk_target, d_ff_128)

    # ---- token tile ----
    tm = min(tm_target, T)                          # block == full dim is always legal

    # ---- shrink (tk first, then tm) until the VMEM estimate fits the budget ----
    while _vmem_estimate(tm, tk, d_model, x_isz, out_isz, f32_out) > budget:
        if tk > 512:
            tk = max(512, _round_up(tk // 2, 128))
        elif tm > 256:
            tm = max(256, _round_up(tm // 2, 8))
        else:
            break

    d_ff_pad = _round_up(d_ff, tk)
    n_k = d_ff_pad // tk
    n_i = pl.cdiv(T, tm)

    # ---- params: bf16 weights (halves the weight stream), f32 biases, zero-pad d_ff ----
    w1c = w1.astype(compute_dtype)
    w2c = w2.astype(compute_dtype)
    b1f = b1.astype(jnp.float32).reshape(1, d_ff)
    b2f = b2.astype(jnp.float32).reshape(1, d_model)
    if d_ff_pad != d_ff:
        pad = d_ff_pad - d_ff
        w1c = jnp.pad(w1c, ((0, 0), (0, pad)))
        w2c = jnp.pad(w2c, ((0, pad), (0, 0)))
        b1f = jnp.pad(b1f, ((0, 0), (0, pad)))

    # ---- cost estimate: weights are re-streamed per token tile unless resident ----
    w_stream = 1 if n_k == 1 else n_i
    cost = pl.CostEstimate(
        flops=4 * T * d_model * d_ff,
        transcendentals=0,
        bytes_accessed=(T * d_model * (x_isz + out_isz)
                        + w_stream * 4 * d_model * d_ff_pad      # W1 + W2 bf16
                        + (d_ff_pad + d_model) * 4),             # biases f32
    )

    in_specs = [
        pl.BlockSpec((tm, d_model), lambda i, k: (i, 0)),   # x tile (original dtype)
        pl.BlockSpec((d_model, tk), lambda i, k: (0, k)),   # W1 chunk (bf16)
        pl.BlockSpec((1, tk), lambda i, k: (0, k)),         # b1 chunk (f32)
        pl.BlockSpec((tk, d_model), lambda i, k: (k, 0)),   # W2 chunk (bf16)
        pl.BlockSpec((1, d_model), lambda i, k: (0, 0)),    # b2 (resident, f32)
    ]
    out_spec = pl.BlockSpec((tm, d_model), lambda i, k: (i, 0))

    if f32_out:
        kernel = _ffn_kernel_accout
        scratch_shapes = []
    else:
        kernel = _ffn_kernel_castout
        scratch_shapes = [pltpu.VMEM((tm, d_model), jnp.float32)]

    grid_spec = pltpu.PrefetchScalarGridSpec(
        num_scalar_prefetch=0,
        grid=(n_i, n_k),
        in_specs=in_specs,
        out_specs=out_spec,
        scratch_shapes=scratch_shapes,
    )

    out2d = pl.pallas_call(
        kernel,
        out_shape=jax.ShapeDtypeStruct((T, d_model), out_dtype),
        grid_spec=grid_spec,
        compiler_params=pltpu.CompilerParams(
            dimension_semantics=("parallel", "arbitrary"),
            vmem_limit_bytes=vmem_limit,
        ),
        cost_estimate=cost,
    )(x2d, w1c, b1f, w2c, b2f)

    return out2d.reshape(orig_shape)


# ----------------------------- init / test --------------------------------------


def init_params(key, d_model, d_ff, dtype=jnp.float32):
    """Init mimicking PyTorch nn.Linear (uniform +-1/sqrt(fan_in)), weights pre-transposed."""
    k1, k2, k3, k4 = jax.random.split(key, 4)
    lim1 = 1.0 / (d_model ** 0.5)
    lim2 = 1.0 / (d_ff ** 0.5)
    w1 = jax.random.uniform(k1, (d_model, d_ff), dtype, minval=-lim1, maxval=lim1)
    b1 = jax.random.uniform(k2, (1, d_ff), dtype, minval=-lim1, maxval=lim1)
    w2 = jax.random.uniform(k3, (d_ff, d_model), dtype, minval=-lim2, maxval=lim2)
    b2 = jax.random.uniform(k4, (1, d_model), dtype, minval=-lim2, maxval=lim2)
    return w1, b1, w2, b2


if __name__ == "__main__":
    key = jax.random.PRNGKey(0)
    # Small but lane-dense shapes (d_model multiple of 128 keeps output stores unmasked).
    B, S, d_model, d_ff = 2, 8, 128, 256

    kx, kp = jax.random.split(key)
    x = jax.random.normal(kx, (B, S, d_model), jnp.float32)
    w1, b1, w2, b2 = init_params(kp, d_model, d_ff)

    out = positionwise_ffn(x, w1, b1, w2, b2)
    jax.block_until_ready(out)

    # Pure-JAX f32 reference (kernel uses bf16 MXU inputs with f32 accumulation,
    # so tolerances are loosened accordingly).
    ref = jnp.maximum(x @ w1 + b1[0], 0.0) @ w2 + b2[0]
    assert out.shape == (B, S, d_model)
    assert jnp.allclose(out, ref, atol=3e-2, rtol=3e-2), float(jnp.max(jnp.abs(out - ref)))

    print("KERNEL_OK")
</pallas_src>

<mosaic_0001>
module attributes {stable_mosaic.version = 11 : i64} {
  func.func @_ffn_kernel_accout(%arg0: i32, %arg1: i32, %arg2: memref<16x128xf32, #tpu.memory_space<vmem>>, %arg3: memref<128x256xbf16, #tpu.memory_space<vmem>>, %arg4: memref<1x256xf32, #tpu.memory_space<vmem>>, %arg5: memref<256x128xbf16, #tpu.memory_space<vmem>>, %arg6: memref<1x128xf32, #tpu.memory_space<vmem>>, %arg7: memref<16x128xf32, #tpu.memory_space<vmem>>) attributes {dimension_semantics = [#tpu.dimension_semantics<parallel>, #tpu.dimension_semantics<arbitrary>], iteration_bounds = array<i64: 1, 1>, scalar_prefetch = 0 : i64, scratch_operands = 0 : i64, tpu.core_type = #tpu.core_type<tc>, window_params = [{transform_indices = @transform_0, window_bounds = array<i64: 16, 128>}, {transform_indices = @transform_1, window_bounds = array<i64: 128, 256>}, {transform_indices = @transform_2, window_bounds = array<i64: 1, 256>}, {transform_indices = @transform_3, window_bounds = array<i64: 256, 128>}, {pipeline_mode = #tpu.pipeline_mode<synchronous>, transform_indices = @transform_4, window_bounds = array<i64: 1, 128>}, {transform_indices = @transform_5, window_bounds = array<i64: 16, 128>}]} {
    %c0_i32 = arith.constant 0 : i32
    %0 = arith.cmpi eq, %arg1, %c0_i32 : i32
    %1 = arith.extui %0 : i1 to i32
    %c0_i32_0 = arith.constant 0 : i32
    %2 = arith.cmpi ne, %1, %c0_i32_0 : i32
    scf.if %2 {
      %c0_14 = arith.constant 0 : index
      %c0_15 = arith.constant 0 : index
      %18 = vector.load %arg6[%c0_14, %c0_15] : memref<1x128xf32, #tpu.memory_space<vmem>>, vector<1x128xf32>
      %19 = vector.shape_cast %18 : vector<1x128xf32> to vector<1x128xf32>
      %20 = vector.broadcast %19 : vector<1x128xf32> to vector<16x128xf32>
      %c0_16 = arith.constant 0 : index
      %c0_17 = arith.constant 0 : index
      %21 = vector.load %arg7[%c0_16, %c0_17] : memref<16x128xf32, #tpu.memory_space<vmem>>, vector<16x128xf32>
      tpu.vector_store %arg7[%c0_16, %c0_17], %20 {strides = array<i32>} : memref<16x128xf32, #tpu.memory_space<vmem>>, vector<16x128xf32>,
    } else {
    }
    %c0 = arith.constant 0 : index
    %c0_1 = arith.constant 0 : index
    %3 = vector.load %arg2[%c0, %c0_1] : memref<16x128xf32, #tpu.memory_space<vmem>>, vector<16x128xf32>
    %4 = arith.truncf %3 : vector<16x128xf32> to vector<16x128xbf16>
    %c0_2 = arith.constant 0 : index
    %c0_3 = arith.constant 0 : index
    %5 = vector.load %arg3[%c0_2, %c0_3] : memref<128x256xbf16, #tpu.memory_space<vmem>>, vector<128x256xbf16>
    %cst = arith.constant dense<0.000000e+00> : vector<16x256xf32>
    %6 = tpu.matmul %4, %5, %cst {dimension_numbers = #tpu.dot_dimension_numbers<[1], [0], [0], [1], [0, 0, 1, 1], [], []>} : vector<16x128xbf16>, vector<128x256xbf16>, vector<16x256xf32> -> vector<16x256xf32>
    %c0_4 = arith.constant 0 : index
    %c0_5 = arith.constant 0 : index
    %7 = vector.load %arg4[%c0_4, %c0_5] : memref<1x256xf32, #tpu.memory_space<vmem>>, vector<1x256xf32>
    %8 = vector.broadcast %7 : vector<1x256xf32> to vector<16x256xf32>
    %9 = arith.addf %6, %8 : vector<16x256xf32>
    %cst_6 = arith.constant 0.000000e+00 : f32
    %10 = vector.broadcast %cst_6 : f32 to vector<16x256xf32>
    %11 = arith.maximumf %9, %10 : vector<16x256xf32>
    %c0_7 = arith.constant 0 : index
    %c0_8 = arith.constant 0 : index
    %12 = vector.load %arg7[%c0_7, %c0_8] : memref<16x128xf32, #tpu.memory_space<vmem>>, vector<16x128xf32>
    %13 = arith.truncf %11 : vector<16x256xf32> to vector<16x256xbf16>
    %c0_9 = arith.constant 0 : index
    %c0_10 = arith.constant 0 : index
    %14 = vector.load %arg5[%c0_9, %c0_10] : memref<256x128xbf16, #tpu.memory_space<vmem>>, vector<256x128xbf16>
    %cst_11 = arith.constant dense<0.000000e+00> : vector<16x128xf32>
    %15 = tpu.matmul %13, %14, %cst_11 {dimension_numbers = #tpu.dot_dimension_numbers<[1], [0], [0], [1], [0, 0, 1, 1], [], []>} : vector<16x256xbf16>, vector<256x128xbf16>, vector<16x128xf32> -> vector<16x128xf32>
    %16 = arith.addf %12, %15 : vector<16x128xf32>
    %c0_12 = arith.constant 0 : index
    %c0_13 = arith.constant 0 : index
    %17 = vector.load %arg7[%c0_12, %c0_13] : memref<16x128xf32, #tpu.memory_space<vmem>>, vector<16x128xf32>
    tpu.vector_store %arg7[%c0_12, %c0_13], %16 {strides = array<i32>} : memref<16x128xf32, #tpu.memory_space<vmem>>, vector<16x128xf32>,
    return
  }
  func.func @transform_0(%arg0: i32, %arg1: i32) -> (i32, i32) {
    %c0_i32 = arith.constant 0 : i32
    %c0_i32_0 = arith.constant 0 : i32
    return %arg0, %c0_i32 : i32, i32
  }
  func.func @transform_1(%arg0: i32, %arg1: i32) -> (i32, i32) {
    %c0_i32 = arith.constant 0 : i32
    %c0_i32_0 = arith.constant 0 : i32
    return %c0_i32, %arg1 : i32, i32
  }
  func.func @transform_2(%arg0: i32, %arg1: i32) -> (i32, i32) {
    %c0_i32 = arith.constant 0 : i32
    %c0_i32_0 = arith.constant 0 : i32
    return %c0_i32, %arg1 : i32, i32
  }
  func.func @transform_3(%arg0: i32, %arg1: i32) -> (i32, i32) {
    %c0_i32 = arith.constant 0 : i32
    %c0_i32_0 = arith.constant 0 : i32
    return %arg1, %c0_i32 : i32, i32
  }
  func.func @transform_4(%arg0: i32, %arg1: i32) -> (i32, i32) {
    %c0_i32 = arith.constant 0 : i32
    %c0_i32_0 = arith.constant 0 : i32
    %c0_i32_1 = arith.constant 0 : i32
    return %c0_i32, %c0_i32_0 : i32, i32
  }
  func.func @transform_5(%arg0: i32, %arg1: i32) -> (i32, i32) {
    %c0_i32 = arith.constant 0 : i32
    %c0_i32_0 = arith.constant 0 : i32
    return %arg0, %c0_i32 : i32, i32
  }
}

</mosaic_0001>

<llo_original>
// kernel: tpu_custom_call.1
$region0: #{tpu_custom_call.1}
  #allocation0 [shape = 'u32[]', space=smem, size = 0x4, offset = 0x4, fixed_abs, tag = 'smem constant byte address 0x4 - core index']
  #allocation1 [shape = 'u32[144,128]{1,0:T(1,128)}', space=vmem, size = 0x12000, scoped, tag = 'internal scratch']
  %s0 = inlined_call_operand.hbm [shape: f32[16,128], index: 0, kind: input, shape index: {}]
  %s1 = inlined_call_operand.hbm [shape: bf16[128,256], index: 1, kind: input, shape index: {}]
  %s2 = inlined_call_operand.vmem [shape: f32[1,256], index: 2, kind: input, shape index: {}]
  %s3 = inlined_call_operand.hbm [shape: bf16[256,128], index: 3, kind: input, shape index: {}]
  %s4 = inlined_call_operand.vmem [shape: f32[1,128], index: 4, kind: input, shape index: {}]
  %s5 = inlined_call_operand.hbm [shape: f32[16,128], index: 5, kind: output, shape index: {}]
  %s6 = sld [smem:[#allocation0]]
  $region46: #{tpu_custom_call.1} parent=0
    _
  %s8 = ssub.s32 1, %s6
  %s9 = scalar_select 0, %s8, %s6
  $region1: #{tpu_custom_call.1} parent=0
    #allocation2 [shape = 'u8[8192]{0}', space=vmem, size = 0x2000, scoped, tag = 'input window, operand 0, single buffered']
    #allocation3 [shape = 's32[1]{0}', space=sflag, size = 0x4, scoped, tag = 'scoped memory for tpu_custom_call.1']
    #allocation4 [shape = 's32[1]{0}', space=sflag, size = 0x4, scoped, tag = 'scoped memory for tpu_custom_call.1']
    #allocation5 [shape = 'u8[65536]{0}', space=vmem, size = 0x10000, scoped, tag = 'input window, operand 1, single buffered']
    #allocation6 [shape = 's32[1]{0}', space=sflag, size = 0x4, scoped, tag = 'scoped memory for tpu_custom_call.1']
    #allocation7 [shape = 'u8[65536]{0}', space=vmem, size = 0x10000, scoped, tag = 'input window, operand 3, single buffered']
    #allocation8 [shape = 'u8[8192]{0}', space=vmem, size = 0x2000, scoped, tag = 'output window, operand 0, single buffered']
    %10 = vsyncpa [#allocation3], 0
    %11 = vsyncpa [#allocation6], 0
    %12 = vsyncpa [#allocation4], 0
    // Predicated region
    $region2: #{tpu_custom_call.1} parent=1 // pred_check
      _
    $region3: #{tpu_custom_call.1} parent=1 // pred_check_branch
      %14 = sbr.rel (0) target = $region5
    $region4: #{tpu_custom_call.1} parent=1 // pred_region
      %s16 = ssub.s32 256, 256
      %17 = vsyncadd [#allocation3], %s16
      %s18 = sshll.u32 [#allocation2], 4
      %s19 = int_to_ptr.vmem [resolvable:$true] %s18
      %24 = dma.hbm_to_vmem [thread:$0]  %s0, 256, %s19, [#allocation3], 128, 128, 8
    $region5: #{tpu_custom_call.1} parent=1 // pred_fallthru
      _
    // Predicated region
    $region6: #{tpu_custom_call.1} parent=1 // pred_check
      _
    $region7: #{tpu_custom_call.1} parent=1 // pred_check_branch
      %26 = sbr.rel (0) target = $region9
    $region8: #{tpu_custom_call.1} parent=1 // pred_region
      %s28 = ssub.s32 2048, 2048
      %29 = vsyncadd [#allocation6], %s28
      %s30 = sshll.u32 [#allocation5], 4
      %s31 = int_to_ptr.vmem [resolvable:$true] %s30
      %36 = dma.hbm_to_vmem [thread:$0]  %s1, 2048, %s31, [#allocation6], 128, 128, 8
    $region9: #{tpu_custom_call.1} parent=1 // pred_fallthru
      _
    // Predicated region
    $region10: #{tpu_custom_call.1} parent=1 // pred_check
      _
    $region11: #{tpu_custom_call.1} parent=1 // pred_check_branch
      %38 = sbr.rel (0) target = $region13
    $region12: #{tpu_custom_call.1} parent=1 // pred_region
      _
    $region13: #{tpu_custom_call.1} parent=1 // pred_fallthru
      _
    // Predicated region
    $region14: #{tpu_custom_call.1} parent=1 // pred_check
      _
    $region15: #{tpu_custom_call.1} parent=1 // pred_check_branch
      %40 = sbr.rel (0) target = $region17
    $region16: #{tpu_custom_call.1} parent=1 // pred_region
      %s42 = ssub.s32 2048, 2048
      %43 = vsyncadd [#allocation6], %s42
      %s44 = sshll.u32 [#allocation7], 4
      %s45 = int_to_ptr.vmem [resolvable:$true] %s44
      %50 = dma.hbm_to_vmem [thread:$0]  %s3, 2048, %s45, [#allocation6], 64, 64, 4
    $region17: #{tpu_custom_call.1} parent=1 // pred_fallthru
      _
    // Predicated region
    $region18: #{tpu_custom_call.1} parent=1 // pred_check
      _
    $region19: #{tpu_custom_call.1} parent=1 // pred_check_branch
      %52 = sbr.rel (0) target = $region21
    $region20: #{tpu_custom_call.1} parent=1 // pred_region
      _
    $region21: #{tpu_custom_call.1} parent=1 // pred_fallthru
      _
    // Predicated region
    $region22: #{tpu_custom_call.1} parent=1 // pred_check
      _
    $region23: #{tpu_custom_call.1} parent=1 // pred_check_branch
      %54 = sbr.rel (0) target = $region25
    $region24: #{tpu_custom_call.1} parent=1 // pred_region
      %55 = dma.done [#allocation3], 256
    $region25: #{tpu_custom_call.1} parent=1 // pred_fallthru
      _
    // Predicated region
    $region26: #{tpu_custom_call.1} parent=1 // pred_check
      _
    $region27: #{tpu_custom_call.1} parent=1 // pred_check_branch
      %57 = sbr.rel (0) target = $region29
    $region28: #{tpu_custom_call.1} parent=1 // pred_region
      %58 = dma.done [#allocation6], 2048
    $region29: #{tpu_custom_call.1} parent=1 // pred_fallthru
      _
    // Predicated region
    $region30: #{tpu_custom_call.1} parent=1 // pred_check
      _
    $region31: #{tpu_custom_call.1} parent=1 // pred_check_branch
      %60 = sbr.rel (0) target = $region33
    $region32: #{tpu_custom_call.1} parent=1 // pred_region
      %61 = dma.done [#allocation6], 2048
    $region33: #{tpu_custom_call.1} parent=1 // pred_fallthru
      _
    %p63 = scmp.eq.s32.totalorder 0, 0
    // Predicated region
    $region34: #{tpu_custom_call.1} parent=1 // pred_check
      %p64 = pneg %p63
    $region35: #{tpu_custom_call.1} parent=1 // pred_check_branch
      %66 = sbr.rel (%p64) target = $region37
    $region36: #{tpu_custom_call.1} parent=1 // pred_region
      %v67 = vld [vmem:[%s4] sm:$0x1]
      %v69 = vlaneseq
      %v70 = vshrl.u32 %v69, 7
      %v71 = vsub.s32 0, %v70
      %v72 = vrot.slane %v67, %v71
      %74 = vst [vmem:[#allocation8] sm:$0xff] %v72
      %75 = vst [vmem:[#allocation8 + $0x8] sm:$0xff] %v72
    $region37: #{tpu_custom_call.1} parent=1 // pred_fallthru
      _
    %v76 = vld [vmem:[#allocation2] sm:$0xff]
    %v77 = vld [vmem:[#allocation2 + $0x8] sm:$0xff]
    %v78 = vpack.c.bf16 %v77, %v76
    %v79 = vld [vmem:[#allocation5] sm:$0xff]
    %v80 = vld [vmem:[#allocation5 + $0x8] sm:$0xff]
    %v81 = vld [vmem:[#allocation5 + $0x10] sm:$0xff]
    %v82 = vld [vmem:[#allocation5 + $0x18] sm:$0xff]
    %v83 = vld [vmem:[#allocation5 + $0x20] sm:$0xff]
    %v84 = vld [vmem:[#allocation5 + $0x28] sm:$0xff]
    %v85 = vld [vmem:[#allocation5 + $0x30] sm:$0xff]
    %v86 = vld [vmem:[#allocation5 + $0x38] sm:$0xff]
    %v87 = vld [vmem:[#allocation5 + $0x40] sm:$0xff]
    %v88 = vld [vmem:[#allocation5 + $0x48] sm:$0xff]
    %v89 = vld [vmem:[#allocation5 + $0x50] sm:$0xff]
    %v90 = vld [vmem:[#allocation5 + $0x58] sm:$0xff]
    %v91 = vld [vmem:[#allocation5 + $0x60] sm:$0xff]
    %v92 = vld [vmem:[#allocation5 + $0x68] sm:$0xff]
    %v93 = vld [vmem:[#allocation5 + $0x70] sm:$0xff]
    %v94 = vld [vmem:[#allocation5 + $0x78] sm:$0xff]
    %v95 = vld [vmem:[%s2] sm:$0x3]
    %v97 = vlaneseq
    %v98 = vshrl.u32 %v97, 7
    %v99 = vsub.s32 0, %v98
    %v100 = vrot.slane %v95, %v99
    %v101 = vlaneseq
    %v102 = vshrl.u32 %v101, 7
    %v103 = vsub.s32 1, %v102
    %v104 = vrot.slane %v95, %v103
    %v123 = vunpack.c.l.b16 %v79
    %v124 = vunpack.c.h.b16 %v79
    %v125 = vunpack.c.l.b16 %v80
    %v126 = vunpack.c.h.b16 %v80
    %v127 = vunpack.c.l.b16 %v81
    %v128 = vunpack.c.h.b16 %v81
    %v129 = vunpack.c.l.b16 %v82
    %v130 = vunpack.c.h.b16 %v82
    %v131 = vunpack.c.l.b16 %v83
    %v132 = vunpack.c.h.b16 %v83
    %v133 = vunpack.c.l.b16 %v84
    %v134 = vunpack.c.h.b16 %v84
    %v135 = vunpack.c.l.b16 %v85
    %v136 = vunpack.c.h.b16 %v85
    %v137 = vunpack.c.l.b16 %v86
    %v138 = vunpack.c.h.b16 %v86
    %v139 = vunpack.c.l.b16 %v87
    %v140 = vunpack.c.h.b16 %v87
    %v141 = vunpack.c.l.b16 %v88
    %v142 = vunpack.c.h.b16 %v88
    %v143 = vunpack.c.l.b16 %v89
    %v144 = vunpack.c.h.b16 %v89
    %v145 = vunpack.c.l.b16 %v90
    %v146 = vunpack.c.h.b16 %v90
    %v147 = vunpack.c.l.b16 %v91
    %v148 = vunpack.c.h.b16 %v91
    %v149 = vunpack.c.l.b16 %v92
    %v150 = vunpack.c.h.b16 %v92
    %v151 = vunpack.c.l.b16 %v93
    %v152 = vunpack.c.h.b16 %v93
    %v153 = vunpack.c.l.b16 %v94
    %v154 = vunpack.c.h.b16 %v94
    %v155 = vpack.c.b16 %v125, %v123
    %v156 = vpack.c.b16 %v126, %v124
    %v157 = vpack.c.b16 %v129, %v127
    %v158 = vpack.c.b16 %v130, %v128
    %v159 = vpack.c.b16 %v133, %v131
    %v160 = vpack.c.b16 %v134, %v132
    %v161 = vpack.c.b16 %v137, %v135
    %v162 = vpack.c.b16 %v138, %v136
    %v163 = vpack.c.b16 %v141, %v139
    %v164 = vpack.c.b16 %v142, %v140
    %v165 = vpack.c.b16 %v145, %v143
    %v166 = vpack.c.b16 %v146, %v144
    %v167 = vpack.c.b16 %v149, %v147
    %v168 = vpack.c.b16 %v150, %v148
    %v169 = vpack.c.b16 %v153, %v151
    %v170 = vpack.c.b16 %v154, %v152
    %187 = vmatprep.subr.bf16.mxu0 %v156
    %188 = vmatpush1.bf16.msra.mxu0 %v155
    %189 = vmatprep.subr.bf16.mxu0 %v158
    %190 = vmatpush1.bf16.msra.mxu0 %v157
    %191 = vmatprep.subr.bf16.mxu0 %v160
    %192 = vmatpush1.bf16.msra.mxu0 %v159
    %193 = vmatprep.subr.bf16.mxu0 %v162
    %194 = vmatpush1.bf16.msra.mxu0 %v161
    %195 = vmatprep.subr.bf16.mxu0 %v164
    %196 = vmatpush1.bf16.msra.mxu0 %v163
    %197 = vmatprep.subr.bf16.mxu0 %v166
    %198 = vmatpush1.bf16.msra.mxu0 %v165
    %199 = vmatprep.subr.bf16.mxu0 %v168
    %200 = vmatpush1.bf16.msra.mxu0 %v167
    %201 = vmatprep.subr.bf16.mxu0 %v170
    %202 = vmatpush1.bf16.msra.mxu0 %v169
    %203 = vmatprep.subr.bf16.mxu0 0
    %204 = vmatpush1.bf16.msra.mxu0 0
    %205 = vmatprep.subr.bf16.mxu0 0
    %206 = vmatpush1.bf16.msra.mxu0 0
    %207 = vmatprep.subr.bf16.mxu0 0
    %208 = vmatpush1.bf16.msra.mxu0 0
    %209 = vmatprep.subr.bf16.mxu0 0
    %210 = vmatpush1.bf16.msra.mxu0 0
    %211 = vmatprep.subr.bf16.mxu0 0
    %212 = vmatpush1.bf16.msra.mxu0 0
    %213 = vmatprep.subr.bf16.mxu0 0
    %214 = vmatpush1.bf16.msra.mxu0 0
    %215 = vmatprep.subr.bf16.mxu0 0
    %216 = vmatpush1.bf16.msra.mxu0 0
    %217 = vmatprep.subr.bf16.mxu0 0
    %218 = vmatpush1.bf16.msra.mxu0 0
    %219 = vmatprep.mubr.bf16.mxu0 0
    %220 = vmatmul.mubr.bf16.gmra.mrb[0].mxu0 %v78
    %v221 = vpop.f32.mrb[0].mxu0
    %v222 = vadd.f32 %v100, %v221
    %v223 = vpop.f32.mrb[0].mxu0
    %v224 = vadd.f32 %v104, %v223
    %v225 = vpop.f32.mrb[0].mxu0
    %v226 = vadd.f32 %v100, %v225
    %v227 = vpop.f32.mrb[0].mxu0
    %v228 = vadd.f32 %v104, %v227
    %229 = vdwg.mxu0
    %v230 = vmax.f32 %v222, 0.0
    %v231 = vmax.f32 %v224, 0.0
    %v232 = vmax.f32 %v226, 0.0
    %v233 = vmax.f32 %v228, 0.0
    %v234 = vld [vmem:[#allocation8] sm:$0xff]
    %v235 = vld [vmem:[#allocation8 + $0x8] sm:$0xff]
    %v236 = vpack.c.bf16 %v232, %v230
    %v237 = vpack.c.bf16 %v233, %v231
    %v238 = vld [vmem:[#allocation7] sm:$0xf]
    %v239 = vld [vmem:[#allocation7 + $0x4] sm:$0xf]
    %v240 = vld [vmem:[#allocation7 + $0x8] sm:$0xf]
    %v241 = vld [vmem:[#allocation7 + $0xc] sm:$0xf]
    %v242 = vld [vmem:[#allocation7 + $0x10] sm:$0xf]
    %v243 = vld [vmem:[#allocation7 + $0x14] sm:$0xf]
    %v244 = vld [vmem:[#allocation7 + $0x18] sm:$0xf]
    %v245 = vld [vmem:[#allocation7 + $0x1c] sm:$0xf]
    %v246 = vld [vmem:[#allocation7 + $0x20] sm:$0xf]
    %v247 = vld [vmem:[#allocation7 + $0x24] sm:$0xf]
    %v248 = vld [vmem:[#allocation7 + $0x28] sm:$0xf]
    %v249 = vld [vmem:[#allocation7 + $0x2c] sm:$0xf]
    %v250 = vld [vmem:[#allocation7 + $0x30] sm:$0xf]
    %v251 = vld [vmem:[#allocation7 + $0x34] sm:$0xf]
    %v252 = vld [vmem:[#allocation7 + $0x38] sm:$0xf]
    %v253 = vld [vmem:[#allocation7 + $0x3c] sm:$0xf]
    %v254 = vld [vmem:[#allocation7 + $0x40] sm:$0xf]
    %v255 = vld [vmem:[#allocation7 + $0x44] sm:$0xf]
    %v256 = vld [vmem:[#allocation7 + $0x48] sm:$0xf]
    %v257 = vld [vmem:[#allocation7 + $0x4c] sm:$0xf]
    %v258 = vld [vmem:[#allocation7 + $0x50] sm:$0xf]
    %v259 = vld [vmem:[#allocation7 + $0x54] sm:$0xf]
    %v260 = vld [vmem:[#allocation7 + $0x58] sm:$0xf]
    %v261 = vld [vmem:[#allocation7 + $0x5c] sm:$0xf]
    %v262 = vld [vmem:[#allocation7 + $0x60] sm:$0xf]
    %v263 = vld [vmem:[#allocation7 + $0x64] sm:$0xf]
    %v264 = vld [vmem:[#allocation7 + $0x68] sm:$0xf]
    %v265 = vld [vmem:[#allocation7 + $0x6c] sm:$0xf]
    %v266 = vld [vmem:[#allocation7 + $0x70] sm:$0xf]
    %v267 = vld [vmem:[#allocation7 + $0x74] sm:$0xf]
    %v268 = vld [vmem:[#allocation7 + $0x78] sm:$0xf]
    %v269 = vld [vmem:[#allocation7 + $0x7c] sm:$0xf]
    %v302 = vunpack.c.l.b16 %v238
    %v303 = vunpack.c.l.b16 %v239
    %v304 = vunpack.c.l.b16 %v240
    %v305 = vunpack.c.l.b16 %v241
    %v306 = vunpack.c.l.b16 %v242
    %v307 = vunpack.c.l.b16 %v243
    %v308 = vunpack.c.l.b16 %v244
    %v309 = vunpack.c.l.b16 %v245
    %v310 = vunpack.c.l.b16 %v246
    %v311 = vunpack.c.l.b16 %v247
    %v312 = vunpack.c.l.b16 %v248
    %v313 = vunpack.c.l.b16 %v249
    %v314 = vunpack.c.l.b16 %v250
    %v315 = vunpack.c.l.b16 %v251
    %v316 = vunpack.c.l.b16 %v252
    %v317 = vunpack.c.l.b16 %v253
    %v318 = vunpack.c.l.b16 %v254
    %v319 = vunpack.c.l.b16 %v255
    %v320 = vunpack.c.l.b16 %v256
    %v321 = vunpack.c.l.b16 %v257
    %v322 = vunpack.c.l.b16 %v258
    %v323 = vunpack.c.l.b16 %v259
    %v324 = vunpack.c.l.b16 %v260
    %v325 = vunpack.c.l.b16 %v261
    %v326 = vunpack.c.l.b16 %v262
    %v327 = vunpack.c.l.b16 %v263
    %v328 = vunpack.c.l.b16 %v264
    %v329 = vunpack.c.l.b16 %v265
    %v330 = vunpack.c.l.b16 %v266
    %v331 = vunpack.c.l.b16 %v267
    %v332 = vunpack.c.l.b16 %v268
    %v333 = vunpack.c.l.b16 %v269
    %v334 = vpack.c.b16 %v303, %v302
    %v335 = vpack.c.b16 %v305, %v304
    %v336 = vpack.c.b16 %v307, %v306
    %v337 = vpack.c.b16 %v309, %v308
    %v338 = vpack.c.b16 %v311, %v310
    %v339 = vpack.c.b16 %v313, %v312
    %v340 = vpack.c.b16 %v315, %v314
    %v341 = vpack.c.b16 %v317, %v316
    %v342 = vpack.c.b16 %v319, %v318
    %v343 = vpack.c.b16 %v321, %v320
    %v344 = vpack.c.b16 %v323, %v322
    %v345 = vpack.c.b16 %v325, %v324
    %v346 = vpack.c.b16 %v327, %v326
    %v347 = vpack.c.b16 %v329, %v328
    %v348 = vpack.c.b16 %v331, %v330
    %v349 = vpack.c.b16 %v333, %v332
    %366 = vmatprep.subr.bf16.mxu0 0
    %367 = vmatpush1.bf16.msra.mxu0 %v334
    %368 = vmatprep.subr.bf16.mxu0 0
    %369 = vmatpush1.bf16.msra.mxu0 %v335
    %370 = vmatprep.subr.bf16.mxu0 0
    %371 = vmatpush1.bf16.msra.mxu0 %v336
    %372 = vmatprep.subr.bf16.mxu0 0
    %373 = vmatpush1.bf16.msra.mxu0 %v337
    %374 = vmatprep.subr.bf16.mxu0 0
    %375 = vmatpush1.bf16.msra.mxu0 %v338
    %376 = vmatprep.subr.bf16.mxu0 0
    %377 = vmatpush1.bf16.msra.mxu0 %v339
    %378 = vmatprep.subr.bf16.mxu0 0
    %379 = vmatpush1.bf16.msra.mxu0 %v340
    %380 = vmatprep.subr.bf16.mxu0 0
    %381 = vmatpush1.bf16.msra.mxu0 %v341
    %382 = vmatprep.subr.bf16.mxu0 0
    %383 = vmatpush1.bf16.msra.mxu0 %v342
    %384 = vmatprep.subr.bf16.mxu0 0
    %385 = vmatpush1.bf16.msra.mxu0 %v343
    %386 = vmatprep.subr.bf16.mxu0 0
    %387 = vmatpush1.bf16.msra.mxu0 %v344
    %388 = vmatprep.subr.bf16.mxu0 0
    %389 = vmatpush1.bf16.msra.mxu0 %v345
    %390 = vmatprep.subr.bf16.mxu0 0
    %391 = vmatpush1.bf16.msra.mxu0 %v346
    %392 = vmatprep.subr.bf16.mxu0 0
    %393 = vmatpush1.bf16.msra.mxu0 %v347
    %394 = vmatprep.subr.bf16.mxu0 0
    %395 = vmatpush1.bf16.msra.mxu0 %v348
    %396 = vmatprep.subr.bf16.mxu0 0
    %397 = vmatpush1.bf16.msra.mxu0 %v349
    %398 = vmatprep.mubr.bf16.mxu0 %v237
    %399 = vmatmul.mubr.bf16.gmra.mrb[0].mxu0 %v236
    %v400 = vpop.f32.mrb[0].mxu0
    %v401 = vadd.f32 0.0, %v400
    %v402 = vpop.f32.mrb[0].mxu0
    %v403 = vpop.f32.mrb[0].mxu0
    %v404 = vadd.f32 0.0, %v403
    %v405 = vpop.f32.mrb[0].mxu0
    %406 = vdwg.mxu0
    %v407 = vadd.f32 %v234, %v401
    %v408 = vadd.f32 %v235, %v404
    %409 = vst [vmem:[#allocation8] sm:$0xff] %v407
    %410 = vst [vmem:[#allocation8 + $0x8] sm:$0xff] %v408
    // Predicated region
    $region38: #{tpu_custom_call.1} parent=1 // pred_check
      _
    $region39: #{tpu_custom_call.1} parent=1 // pred_check_branch
      %412 = sbr.rel (0) target = $region41
    $region40: #{tpu_custom_call.1} parent=1 // pred_region
      %s414 = ssub.s32 256, 256
      %415 = vsyncadd [#allocation4], %s414
      %s416 = sshll.u32 [#allocation8], 4
      %s417 = int_to_ptr.vmem [resolvable:$true] %s416
      %422 = dma.vmem_to_hbm [thread:$0]  %s417, 256, %s5, [#allocation4], 128, 128, 8
    $region41: #{tpu_custom_call.1} parent=1 // pred_fallthru
      _
    // Predicated region
    $region42: #{tpu_custom_call.1} parent=1 // pred_check
      _
    $region43: #{tpu_custom_call.1} parent=1 // pred_check_branch
      %424 = sbr.rel (0) target = $region45
    $region44: #{tpu_custom_call.1} parent=1 // pred_region
      %425 = dma.done [#allocation4], 256
    $region45: #{tpu_custom_call.1} parent=1 // pred_fallthru
      _
    %426 = vsyncpa [#allocation3], 1
    %427 = vsyncpa [#allocation6], 1
    %428 = vsyncpa [#allocation4], 1

</llo_original>
